<compile_context>
chip_gen: v7x
topology: tpu7x:2x2x1
jax: 0.10.0
libtpu: 0.0.40
codegen_flags: <defaults>
</compile_context>

<pallas_src>
import jax
import jax.numpy as jnp
from jax.experimental import pallas as pl
from jax.experimental.pallas import tpu as pltpu


def _identity_kernel(x_ref, o_ref):
    # Trivial elementwise passthrough (pure vld + vst on one vreg-sized tile).
    o_ref[...] = x_ref[...]


def _run_placeholder_kernel(x: jax.Array) -> jax.Array:
    """Runs a minimal single-block Pallas TPU identity kernel on `x`.

    Smoke-test only — kept off any production path. The whole array is a
    single lane-dense block (no grid tiling; last dim should be a multiple of
    128 and the row dim a multiple of 8 for f32). Output aliases the input
    HBM buffer, so `x` is donated: do not reuse it after this call.
    """
    R, C = x.shape
    return pl.pallas_call(
        _identity_kernel,
        out_shape=jax.ShapeDtypeStruct((R, C), x.dtype),
        grid_spec=pl.GridSpec(
            grid=(1,),
            in_specs=[pl.BlockSpec((R, C), lambda i: (0, 0))],
            out_specs=pl.BlockSpec((R, C), lambda i: (0, 0)),
        ),
        input_output_aliases={0: 0},
    )(x)


class ChordModel:
    """JAX/Pallas equivalent of the (empty) PyTorch ChordModel."""

    def __init__(self):
        # Reference __init__ defines no parameters.
        pass

    def forward(self):
        # TODO(synk): reference forward() is `pass` — no inputs, no compute,
        # returns None; the placeholder Pallas kernel is intentionally kept
        # out of this hot path (it would be pure launch/DMA overhead).
        return None

    __call__ = forward


if __name__ == "__main__":
    # Deterministic example data (unused by the model's forward, which takes
    # no arguments) — used only to exercise the placeholder Pallas kernel once.
    # Minimum aligned f32 tile: (8 sublanes, 128 lanes) = 4 KiB.
    key = jax.random.PRNGKey(0)
    R, C = 8, 128
    x = jax.random.normal(key, (R, C), dtype=jnp.float32)

    # Defensive reference copy: `x` is donated (aliased) to the kernel output.
    x_expected = x + 0.0
    jax.block_until_ready(x_expected)

    y = _run_placeholder_kernel(x)
    jax.block_until_ready(y)
    assert jnp.array_equal(y, x_expected), "placeholder identity kernel mismatch"

    model = ChordModel()
    out = model()  # matches PyTorch forward(): returns None
    assert out is None

    print("KERNEL_OK")
</pallas_src>

<mosaic_0001>
module attributes {stable_mosaic.version = 11 : i64} {
  func.func @_identity_kernel(%arg0: i32, %arg1: memref<8x128xf32, #tpu.memory_space<vmem>>, %arg2: memref<8x128xf32, #tpu.memory_space<vmem>>) attributes {dimension_semantics = [#tpu.dimension_semantics<arbitrary>], iteration_bounds = array<i64: 1>, scalar_prefetch = 0 : i64, scratch_operands = 0 : i64, tpu.core_type = #tpu.core_type<tc>, window_params = [{pipeline_mode = #tpu.pipeline_mode<synchronous>, transform_indices = @transform_0, window_bounds = array<i64: 8, 128>}, {pipeline_mode = #tpu.pipeline_mode<synchronous>, transform_indices = @transform_1, window_bounds = array<i64: 8, 128>}]} {
    %c0 = arith.constant 0 : index
    %c0_0 = arith.constant 0 : index
    %0 = vector.load %arg1[%c0, %c0_0] : memref<8x128xf32, #tpu.memory_space<vmem>>, vector<8x128xf32>
    %c0_1 = arith.constant 0 : index
    %c0_2 = arith.constant 0 : index
    %1 = vector.load %arg2[%c0_1, %c0_2] : memref<8x128xf32, #tpu.memory_space<vmem>>, vector<8x128xf32>
    tpu.vector_store %arg2[%c0_1, %c0_2], %0 {strides = array<i32>} : memref<8x128xf32, #tpu.memory_space<vmem>>, vector<8x128xf32>,
    return
  }
  func.func @transform_0(%arg0: i32) -> (i32, i32) {
    %c0_i32 = arith.constant 0 : i32
    %c0_i32_0 = arith.constant 0 : i32
    %c0_i32_1 = arith.constant 0 : i32
    return %c0_i32, %c0_i32_0 : i32, i32
  }
  func.func @transform_1(%arg0: i32) -> (i32, i32) {
    %c0_i32 = arith.constant 0 : i32
    %c0_i32_0 = arith.constant 0 : i32
    %c0_i32_1 = arith.constant 0 : i32
    return %c0_i32, %c0_i32_0 : i32, i32
  }
}

</mosaic_0001>

<llo_original>
// kernel: tpu_custom_call.1
$region0: #{tpu_custom_call.1}
  #allocation0 [shape = 'u32[]', space=smem, size = 0x4, offset = 0x4, fixed_abs, tag = 'smem constant byte address 0x4 - core index']
  #allocation1 [shape = 'u32[144,128]{1,0:T(1,128)}', space=vmem, size = 0x12000, scoped, tag = 'internal scratch']
  %s0 = inlined_call_operand.hbm [shape: f32[8,128], index: 0, kind: input, shape index: {}, may-alias: {0,1}]
  %s1 = inlined_call_operand.hbm [shape: f32[8,128], index: 1, kind: output, shape index: {}, may-alias: {0,1}]
  %s2 = sld [smem:[#allocation0]]
  $region18: #{tpu_custom_call.1} parent=0
    _
  %s4 = ssub.s32 1, %s2
  %s5 = scalar_select 0, %s4, %s2
  $region1: #{tpu_custom_call.1} parent=0
    #allocation2 [shape = 'u8[4096]{0}', space=vmem, size = 0x1000, scoped, tag = 'input window, operand 0, single buffered']
    #allocation3 [shape = 's32[1]{0}', space=sflag, size = 0x4, scoped, tag = 'scoped memory for tpu_custom_call.1']
    #allocation4 [shape = 's32[1]{0}', space=sflag, size = 0x4, scoped, tag = 'scoped memory for tpu_custom_call.1']
    #allocation5 [shape = 'u8[4096]{0}', space=vmem, size = 0x1000, scoped, tag = 'output window, operand 0, single buffered']
    %6 = vsyncpa [#allocation3], 0
    %7 = vsyncpa [#allocation4], 0
    // Predicated region
    $region2: #{tpu_custom_call.1} parent=1 // pred_check
      _
    $region3: #{tpu_custom_call.1} parent=1 // pred_check_branch
      %9 = sbr.rel (0) target = $region5
    $region4: #{tpu_custom_call.1} parent=1 // pred_region
      %s11 = ssub.s32 128, 128
      %12 = vsyncadd [#allocation3], %s11
      %s14 = sshll.u32 [#allocation2], 4
      %s15 = int_to_ptr.vmem [resolvable:$true] %s14
      %17 = dma.hbm_to_vmem [thread:$0]  %s0, 128, %s15, [#allocation3]
    $region5: #{tpu_custom_call.1} parent=1 // pred_fallthru
      _
    // Predicated region
    $region6: #{tpu_custom_call.1} parent=1 // pred_check
      _
    $region7: #{tpu_custom_call.1} parent=1 // pred_check_branch
      %19 = sbr.rel (0) target = $region9
    $region8: #{tpu_custom_call.1} parent=1 // pred_region
      %20 = dma.done [#allocation3], 128
    $region9: #{tpu_custom_call.1} parent=1 // pred_fallthru
      _
    %v21 = vld [vmem:[#allocation2] sm:$0xff]
    %22 = vst [vmem:[#allocation5] sm:$0xff] %v21
    // Predicated region
    $region10: #{tpu_custom_call.1} parent=1 // pred_check
      _
    $region11: #{tpu_custom_call.1} parent=1 // pred_check_branch
      %24 = sbr.rel (0) target = $region13
    $region12: #{tpu_custom_call.1} parent=1 // pred_region
      %s26 = ssub.s32 128, 128
      %27 = vsyncadd [#allocation4], %s26
      %s29 = sshll.u32 [#allocation5], 4
      %s30 = int_to_ptr.vmem [resolvable:$true] %s29
      %32 = dma.vmem_to_hbm [thread:$0]  %s30, 128, %s1, [#allocation4]
    $region13: #{tpu_custom_call.1} parent=1 // pred_fallthru
      _
    // Predicated region
    $region14: #{tpu_custom_call.1} parent=1 // pred_check
      _
    $region15: #{tpu_custom_call.1} parent=1 // pred_check_branch
      %34 = sbr.rel (0) target = $region17
    $region16: #{tpu_custom_call.1} parent=1 // pred_region
      %35 = dma.done [#allocation4], 128
    $region17: #{tpu_custom_call.1} parent=1 // pred_fallthru
      _
    %36 = vsyncpa [#allocation3], 1
    %37 = vsyncpa [#allocation4], 1

</llo_original>
